<compile_context>
chip_gen: v7x
topology: tpu7x:2x2x1
jax: 0.10.0
libtpu: 0.0.40
codegen_flags: <defaults>
</compile_context>

<pallas_src>
import functools

import jax
import jax.numpy as jnp
from jax.experimental import pallas as pl
from jax.experimental.pallas import tpu as pltpu


def _rmsnorm_kernel(x_ref, g_ref, o_ref, *, eps, hidden):
    # x_ref: (block_rows, H), g_ref: (1, H) float32, o_ref: (block_rows, H)
    x = x_ref[...].astype(jnp.float32)
    g = g_ref[...]  # (1, H) float32, broadcasts over rows
    # mean(x^2) over the hidden axis; multiply by the compile-time 1/H constant
    # so the reduction is a plain XLU row-sum followed by a VPU scale.
    sum_sq = jnp.sum(x * x, axis=-1, keepdims=True)
    mean_sq = sum_sq * (1.0 / hidden)
    inv_rms = jax.lax.rsqrt(mean_sq + eps)  # EUP
    o_ref[...] = (x * inv_rms * g).astype(o_ref.dtype)


def _sublane_packing(dtype) -> int:
    """Rows per sublane group for this dtype (sub-32-bit packs along sublanes)."""
    itemsize = jnp.dtype(dtype).itemsize
    if itemsize >= 4:
        return 8
    if itemsize == 2:
        return 16
    return 32


def _pick_block_rows(rows, hidden, dtype, requested=None):
    """Choose a large, dtype-aligned row tile that fits comfortably in VMEM."""
    packing = _sublane_packing(dtype)
    itemsize = jnp.dtype(dtype).itemsize
    row_bytes = max(1, hidden * itemsize)

    if requested is not None:
        block_rows = int(requested)
    else:
        # Budget ~16 MiB across the pipelined buffers:
        #   2 buffers x (input tile + output tile) x block_rows x row_bytes
        # Conservative for v7x (64 MiB/TC) and v5e defaults, yet each step
        # still moves multi-MB DMAs (near the HBM roofline for realistic H).
        buffer_budget = 16 << 20
        block_rows = max(packing, buffer_budget // (4 * row_bytes))
        block_rows = min(block_rows, 1024)  # diminishing returns past ~1K rows

    # Never exceed the (packing-aligned) number of rows actually present.
    rows_aligned = ((rows + packing - 1) // packing) * packing
    block_rows = min(block_rows, rows_aligned)
    # Align to sublane packing so loads/stores stay unmasked and dense.
    block_rows = max(packing, (block_rows // packing) * packing)
    return block_rows


def rmsnorm(x, gamma, eps, *, block_rows=None):
    """RMSNorm over the last axis of x, scaled by gamma (shape (hidden,))."""
    orig_shape = x.shape
    hidden = orig_shape[-1]
    assert gamma.shape == (hidden,), (gamma.shape, hidden)

    x2d = x.reshape(-1, hidden)
    rows = x2d.shape[0]

    block_rows = _pick_block_rows(rows, hidden, x.dtype, requested=block_rows)
    grid = (pl.cdiv(rows, block_rows),)

    # gamma: tiny, resident across the whole grid; pre-cast to f32 here so the
    # per-step body does no gamma work. Do NOT broadcast it to (block_rows, H).
    g2d = gamma.astype(jnp.float32).reshape(1, hidden)

    # Explicit VMEM limit: double-buffered (in + out) tiles + gamma + headroom.
    itemsize = jnp.dtype(x.dtype).itemsize
    tile_bytes = block_rows * hidden * itemsize
    needed = 2 * 2 * tile_bytes + hidden * 4
    vmem_limit = min(48 << 20, max(16 << 20, int(needed * 1.5) + (4 << 20)))

    out = pl.pallas_call(
        functools.partial(_rmsnorm_kernel, eps=float(eps), hidden=hidden),
        out_shape=jax.ShapeDtypeStruct((rows, hidden), x.dtype),
        grid_spec=pltpu.PrefetchScalarGridSpec(
            num_scalar_prefetch=0,
            grid=grid,
            in_specs=[
                pl.BlockSpec((block_rows, hidden), lambda i: (i, 0)),
                pl.BlockSpec((1, hidden), lambda i: (0, 0)),
            ],
            out_specs=pl.BlockSpec((block_rows, hidden), lambda i: (i, 0)),
        ),
        compiler_params=pltpu.CompilerParams(
            dimension_semantics=("parallel",),
            vmem_limit_bytes=vmem_limit,
        ),
    )(x2d, g2d)

    return out.reshape(orig_shape)


if __name__ == "__main__":
    key = jax.random.PRNGKey(0)
    batch, seq, hidden = 2, 8, 32
    eps = 1e-6

    x = jax.random.normal(key, (batch, seq, hidden), dtype=jnp.float32)
    # Deterministic parameter init matching nn.Parameter(torch.ones(hidden_dim)).
    gamma = jnp.ones((hidden,), dtype=jnp.float32)

    out = rmsnorm(x, gamma, eps)
    out = jax.block_until_ready(out)

    # Reference in plain JAX (same math as the PyTorch module).
    ref = x / jnp.sqrt(jnp.mean(x * x, axis=-1, keepdims=True) + eps) * gamma
    assert out.shape == x.shape
    assert jnp.allclose(out, ref, atol=1e-5, rtol=1e-5)

    print("KERNEL_OK")
</pallas_src>

<mosaic_0001>
module attributes {stable_mosaic.version = 11 : i64} {
  func.func @_rmsnorm_kernel(%arg0: i32, %arg1: memref<16x32xf32, #tpu.memory_space<vmem>>, %arg2: memref<1x32xf32, #tpu.memory_space<vmem>>, %arg3: memref<16x32xf32, #tpu.memory_space<vmem>>) attributes {dimension_semantics = [#tpu.dimension_semantics<parallel>], iteration_bounds = array<i64: 1>, scalar_prefetch = 0 : i64, scratch_operands = 0 : i64, tpu.core_type = #tpu.core_type<tc>, window_params = [{transform_indices = @transform_0, window_bounds = array<i64: 16, 32>}, {pipeline_mode = #tpu.pipeline_mode<synchronous>, transform_indices = @transform_1, window_bounds = array<i64: 1, 32>}, {transform_indices = @transform_2, window_bounds = array<i64: 16, 32>}]} {
    %c0 = arith.constant 0 : index
    %c0_0 = arith.constant 0 : index
    %0 = vector.load %arg1[%c0, %c0_0] : memref<16x32xf32, #tpu.memory_space<vmem>>, vector<16x32xf32>
    %c0_1 = arith.constant 0 : index
    %c0_2 = arith.constant 0 : index
    %1 = vector.load %arg2[%c0_1, %c0_2] : memref<1x32xf32, #tpu.memory_space<vmem>>, vector<1x32xf32>
    %2 = arith.mulf %0, %0 : vector<16x32xf32>
    %cst = arith.constant dense<0.000000e+00> : vector<16xf32>
    %3 = vector.multi_reduction <add>, %2, %cst [1] : vector<16x32xf32> to vector<16xf32>
    %4 = vector.shape_cast %3 : vector<16xf32> to vector<16x1xf32>
    %cst_3 = arith.constant 3.125000e-02 : f32
    %5 = vector.broadcast %cst_3 : f32 to vector<16x1xf32>
    %6 = arith.mulf %4, %5 : vector<16x1xf32>
    %cst_4 = arith.constant 9.99999997E-7 : f32
    %7 = vector.broadcast %cst_4 : f32 to vector<16x1xf32>
    %8 = arith.addf %6, %7 : vector<16x1xf32>
    %9 = math.rsqrt %8 : vector<16x1xf32>
    %10 = vector.broadcast %9 : vector<16x1xf32> to vector<16x32xf32>
    %11 = arith.mulf %0, %10 : vector<16x32xf32>
    %12 = vector.broadcast %1 : vector<1x32xf32> to vector<16x32xf32>
    %13 = arith.mulf %11, %12 : vector<16x32xf32>
    %c0_5 = arith.constant 0 : index
    %c0_6 = arith.constant 0 : index
    %14 = vector.load %arg3[%c0_5, %c0_6] : memref<16x32xf32, #tpu.memory_space<vmem>>, vector<16x32xf32>
    tpu.vector_store %arg3[%c0_5, %c0_6], %13 {strides = array<i32>} : memref<16x32xf32, #tpu.memory_space<vmem>>, vector<16x32xf32>,
    return
  }
  func.func @transform_0(%arg0: i32) -> (i32, i32) {
    %c0_i32 = arith.constant 0 : i32
    %c0_i32_0 = arith.constant 0 : i32
    return %arg0, %c0_i32 : i32, i32
  }
  func.func @transform_1(%arg0: i32) -> (i32, i32) {
    %c0_i32 = arith.constant 0 : i32
    %c0_i32_0 = arith.constant 0 : i32
    %c0_i32_1 = arith.constant 0 : i32
    return %c0_i32, %c0_i32_0 : i32, i32
  }
  func.func @transform_2(%arg0: i32) -> (i32, i32) {
    %c0_i32 = arith.constant 0 : i32
    %c0_i32_0 = arith.constant 0 : i32
    return %arg0, %c0_i32 : i32, i32
  }
}

</mosaic_0001>

<llo_original>
// kernel: tpu_custom_call.1
$region0: #{tpu_custom_call.1}
  #allocation0 [shape = 'u32[]', space=smem, size = 0x4, offset = 0x4, fixed_abs, tag = 'smem constant byte address 0x4 - core index']
  #allocation1 [shape = 'u32[144,128]{1,0:T(1,128)}', space=vmem, size = 0x12000, scoped, tag = 'internal scratch']
  %s0 = inlined_call_operand.hbm [shape: f32[16,32], index: 0, kind: input, shape index: {}]
  %s1 = inlined_call_operand.vmem [shape: f32[1,32], index: 1, kind: input, shape index: {}]
  %s2 = inlined_call_operand.hbm [shape: f32[16,32], index: 2, kind: output, shape index: {}]
  %s3 = sld [smem:[#allocation0]]
  $region22: #{tpu_custom_call.1} parent=0
    _
  %s5 = ssub.s32 1, %s3
  %s6 = scalar_select 0, %s5, %s3
  $region1: #{tpu_custom_call.1} parent=0
    #allocation2 [shape = 'u8[8192]{0}', space=vmem, size = 0x2000, scoped, tag = 'input window, operand 0, single buffered']
    #allocation3 [shape = 's32[1]{0}', space=sflag, size = 0x4, scoped, tag = 'scoped memory for tpu_custom_call.1']
    #allocation4 [shape = 's32[1]{0}', space=sflag, size = 0x4, scoped, tag = 'scoped memory for tpu_custom_call.1']
    #allocation5 [shape = 'u8[8192]{0}', space=vmem, size = 0x2000, scoped, tag = 'output window, operand 0, single buffered']
    %7 = vsyncpa [#allocation3], 0
    %8 = vsyncpa [#allocation4], 0
    // Predicated region
    $region2: #{tpu_custom_call.1} parent=1 // pred_check
      _
    $region3: #{tpu_custom_call.1} parent=1 // pred_check_branch
      %10 = sbr.rel (0) target = $region5
    $region4: #{tpu_custom_call.1} parent=1 // pred_region
      %s12 = ssub.s32 256, 256
      %13 = vsyncadd [#allocation3], %s12
      %s14 = sshll.u32 [#allocation2], 4
      %s15 = int_to_ptr.vmem [resolvable:$true] %s14
      %20 = dma.hbm_to_vmem [thread:$0]  %s0, 256, %s15, [#allocation3], 128, 128, 8
    $region5: #{tpu_custom_call.1} parent=1 // pred_fallthru
      _
    // Predicated region
    $region6: #{tpu_custom_call.1} parent=1 // pred_check
      _
    $region7: #{tpu_custom_call.1} parent=1 // pred_check_branch
      %22 = sbr.rel (0) target = $region9
    $region8: #{tpu_custom_call.1} parent=1 // pred_region
      _
    $region9: #{tpu_custom_call.1} parent=1 // pred_fallthru
      _
    // Predicated region
    $region10: #{tpu_custom_call.1} parent=1 // pred_check
      _
    $region11: #{tpu_custom_call.1} parent=1 // pred_check_branch
      %24 = sbr.rel (0) target = $region13
    $region12: #{tpu_custom_call.1} parent=1 // pred_region
      %25 = dma.done [#allocation3], 256
    $region13: #{tpu_custom_call.1} parent=1 // pred_fallthru
      _
    %v26 = vld [vmem:[#allocation2] sm:$0xff]
    %v27 = vld [vmem:[#allocation2 + $0x8] sm:$0xff]
    %v28 = vld [vmem:[%s1] sm:$0x1]
    %v29 = vmul.f32 %v26, %v26
    %v30 = vmul.f32 %v27, %v27
    %vm31 = vcmask 261120
    %v32 = vsel %vm31, %v29, 0.0
    %33 = vadd.xlane.f32.xlu0 %v32
    %v34 = vpop.xlane.xlu0 %33
    %v35 = vsel %vm31, %v30, 0.0
    %36 = vadd.xlane.f32.xlu0 %v35
    %v37 = vpop.xlane.xlu0 %36
    %v38 = vmul.f32 %v34, 0.03125
    %v39 = vmul.f32 %v37, 0.03125
    %v40 = vadd.f32 %v38, 1e-06
    %v41 = vadd.f32 %v39, 1e-06
    %v42 = vrsqrt.pop %v40
    %v43 = vrsqrt.pop %v41
    %v44 = vmul.f32 %v26, %v42
    %v45 = vmul.f32 %v27, %v43
    %v47 = vlaneseq
    %v48 = vshrl.u32 %v47, 7
    %v49 = vsub.s32 0, %v48
    %v50 = vrot.slane %v28, %v49
    %v52 = vmul.f32 %v44, %v50
    %v53 = vmul.f32 %v45, %v50
    %54 = vst.msk [vmem:[#allocation5] sm:$0xff] %vm31, %v52
    %55 = vst.msk [vmem:[#allocation5 + $0x8] sm:$0xff] %vm31, %v53
    // Predicated region
    $region14: #{tpu_custom_call.1} parent=1 // pred_check
      _
    $region15: #{tpu_custom_call.1} parent=1 // pred_check_branch
      %57 = sbr.rel (0) target = $region17
    $region16: #{tpu_custom_call.1} parent=1 // pred_region
      %s59 = ssub.s32 256, 256
      %60 = vsyncadd [#allocation4], %s59
      %s61 = sshll.u32 [#allocation5], 4
      %s62 = int_to_ptr.vmem [resolvable:$true] %s61
      %67 = dma.vmem_to_hbm [thread:$0]  %s62, 256, %s2, [#allocation4], 128, 128, 8
    $region17: #{tpu_custom_call.1} parent=1 // pred_fallthru
      _
    // Predicated region
    $region18: #{tpu_custom_call.1} parent=1 // pred_check
      _
    $region19: #{tpu_custom_call.1} parent=1 // pred_check_branch
      %69 = sbr.rel (0) target = $region21
    $region20: #{tpu_custom_call.1} parent=1 // pred_region
      %70 = dma.done [#allocation4], 256
    $region21: #{tpu_custom_call.1} parent=1 // pred_fallthru
      _
    %71 = vsyncpa [#allocation3], 1
    %72 = vsyncpa [#allocation4], 1

</llo_original>
